<compile_context>
chip_gen: v7x
topology: tpu7x:2x2x1
jax: 0.10.0
libtpu: 0.0.40
codegen_flags: <defaults>
</compile_context>

<pallas_src>
import functools

import jax
import jax.numpy as jnp
from jax import lax
from jax.experimental import pallas as pl
from jax.experimental.pallas import tpu as pltpu

LANE = 128      # TPU lane width; every feature dim is padded to this.
SUBLANE = 8
EMB_DIM = 10
HIDDEN = 50


def _round_up(x, m):
    return (x + m - 1) // m * m


def _qnet_kernel(idx_ref, emb_ref, ws_ref, bias_ref, o_ref):
    # idx_ref : (TB, 1)       int32  -- state indices for this batch tile
    # emb_ref : (NSp, 128)    f32    -- zero-padded embedding table
    # ws_ref  : (4, 128, 128) f32/bf16 -- zero-padded (in,out) weights, l1..l4
    # bias_ref: (8, 128)      f32    -- rows 0..3 = b1..b4 (zero-padded lanes)
    # o_ref   : (TB, NAp)     f32    -- narrow output (NAp = roundup(A, 8))
    idx = idx_ref[...]
    tb = idx.shape[0]
    ns_p = emb_ref.shape[0]
    cdt = ws_ref.dtype

    # Embedding lookup as one-hot @ table (MXU); exact since each row has a
    # single nonzero.  Out-of-range indices yield an all-zero row (PyTorch
    # nn.Embedding would raise instead).
    iota = lax.broadcasted_iota(jnp.int32, (tb, ns_p), 1)
    onehot = (iota == idx).astype(jnp.float32)                  # (TB, NSp)
    h = jnp.dot(onehot, emb_ref[...],
                preferred_element_type=jnp.float32)             # (TB, 128)

    # Hoist one bias read; rows broadcast against (TB,128) on the VPU.
    b = bias_ref[...]

    # linear_relu_stack; padded lanes carry exact zeros through every layer.
    # Matmul inputs in cdt (bf16 on v6e/v7x), accumulation always f32.
    h = jnp.maximum(
        jnp.dot(h.astype(cdt), ws_ref[0], preferred_element_type=jnp.float32)
        + b[0:1, :], 0.0)
    h = jnp.maximum(
        jnp.dot(h.astype(cdt), ws_ref[1], preferred_element_type=jnp.float32)
        + b[1:2, :], 0.0)
    h = jnp.maximum(
        jnp.dot(h.astype(cdt), ws_ref[2], preferred_element_type=jnp.float32)
        + b[2:3, :], 0.0)
    out = (jnp.dot(h.astype(cdt), ws_ref[3], preferred_element_type=jnp.float32)
           + b[3:4, :])                                          # (TB, 128)
    # Only the first num_actions lanes are real: narrow the HBM writeback.
    o_ref[...] = out[:, :o_ref.shape[1]].astype(o_ref.dtype)


def init_params(key, num_states, num_actions):
    """PyTorch-like init; linears stored (in, out) so y = x @ W + b."""
    ks = jax.random.split(key, 9)

    def linear(kw, kb, fan_in, fan_out):
        bound = 1.0 / jnp.sqrt(jnp.float32(fan_in))
        w = jax.random.uniform(kw, (fan_in, fan_out), jnp.float32, -bound, bound)
        b = jax.random.uniform(kb, (fan_out,), jnp.float32, -bound, bound)
        return w, b

    emb = jax.random.normal(ks[0], (num_states, EMB_DIM), jnp.float32)
    l1 = linear(ks[1], ks[2], EMB_DIM, HIDDEN)
    l2 = linear(ks[3], ks[4], HIDDEN, HIDDEN)
    l3 = linear(ks[5], ks[6], HIDDEN, HIDDEN)
    l4 = linear(ks[7], ks[8], HIDDEN, num_actions)
    return emb, l1, l2, l3, l4


def pack_params(params, *, weight_dtype=jnp.bfloat16):
    """One-time padding of parameters to a lane-dense layout.

    weight_dtype=bfloat16 uses the MXU's native bf16 path on v6e/v7x
    (Q-values deviate ~1e-2 from the f32 reference); pass jnp.float32 for
    bit-faithful parity.  Embedding table and biases stay f32.
    """
    emb, (w1, b1), (w2, b2), (w3, b3), (w4, b4) = params
    num_states = emb.shape[0]
    ns_p = _round_up(max(num_states, SUBLANE), LANE)

    def pad2(a, rows, cols, dtype):
        out = jnp.zeros((rows, cols), dtype)
        return out.at[:a.shape[0], :a.shape[1]].set(a.astype(dtype))

    emb_p = pad2(emb, ns_p, LANE, jnp.float32)
    ws_p = jnp.stack([pad2(w, LANE, LANE, weight_dtype)
                      for w in (w1, w2, w3, w4)])               # (4,128,128)

    bias_p = jnp.zeros((SUBLANE, LANE), jnp.float32)
    for k, bb in enumerate((b1, b2, b3, b4)):
        bias_p = bias_p.at[k, :bb.shape[0]].set(bb)
    return emb_p, ws_p, bias_p


@functools.partial(jax.jit, static_argnames=("num_actions", "block_b"))
def qnetwork_forward(x_idx, packed, *, num_actions, block_b=512):
    """x_idx: int (B,) state indices -> (B, num_actions) float32."""
    emb_p, ws_p, bias_p = packed
    B = x_idx.shape[0]
    ns_p = emb_p.shape[0]
    na_pad = _round_up(num_actions, SUBLANE)

    # Batch tile: always a multiple of SUBLANE (fixes the (8,128) rule for
    # arbitrary user block_b), default 512 rows so each grid step carries a
    # few microseconds of MXU work vs ~0.35us of step overhead.
    tb = _round_up(min(block_b, max(B, 1)), SUBLANE)
    bp = _round_up(B, tb)
    # Prefer >=2 grid steps when the batch allows it so the "parallel" axis
    # can shard across v7x's two TensorCores (no effect on v5e/v6e).
    if bp // tb == 1 and tb > SUBLANE:
        tb = _round_up(tb // 2, SUBLANE)
        bp = _round_up(B, tb)

    idx = jnp.zeros((bp, 1), jnp.int32).at[:B, 0].set(x_idx.astype(jnp.int32))
    grid = (bp // tb,)

    w_item = jnp.dtype(ws_p.dtype).itemsize
    resident_bytes = emb_p.size * 4 + ws_p.size * w_item + bias_p.size * 4
    per_step_bytes = tb * 4 + tb * na_pad * 4
    vmem_limit = int(min(100 << 20,
                         max(32 << 20,
                             2 * resident_bytes + 4 * per_step_bytes
                             + (2 << 20))))

    flops = 2 * bp * (ns_p * LANE + 4 * LANE * LANE)
    bytes_accessed = idx.size * 4 + resident_bytes + bp * na_pad * 4

    out = pl.pallas_call(
        _qnet_kernel,
        out_shape=jax.ShapeDtypeStruct((bp, na_pad), jnp.float32),
        grid=grid,
        in_specs=[
            pl.BlockSpec((tb, 1), lambda i: (i, 0)),             # tile indices
            pl.BlockSpec((ns_p, LANE), lambda i: (0, 0)),        # emb (resident)
            pl.BlockSpec((4, LANE, LANE), lambda i: (0, 0, 0)),  # w1..w4 packed
            pl.BlockSpec((SUBLANE, LANE), lambda i: (0, 0)),     # biases packed
        ],
        out_specs=pl.BlockSpec((tb, na_pad), lambda i: (i, 0)),
        compiler_params=pltpu.CompilerParams(
            dimension_semantics=("parallel",),
            vmem_limit_bytes=vmem_limit),
        cost_estimate=pl.CostEstimate(
            flops=flops, transcendentals=0, bytes_accessed=bytes_accessed),
    )(idx, emb_p, ws_p, bias_p)

    return out[:B, :num_actions]


def reference_forward(x_idx, params):
    """Pure-JAX reference (same math as the PyTorch module)."""
    emb, (w1, b1), (w2, b2), (w3, b3), (w4, b4) = params
    h = emb[x_idx]
    h = jnp.maximum(h @ w1 + b1, 0.0)
    h = jnp.maximum(h @ w2 + b2, 0.0)
    h = jnp.maximum(h @ w3 + b3, 0.0)
    return h @ w4 + b4


if __name__ == "__main__":
    num_states = 16
    num_actions = 4
    batch = 24

    key = jax.random.PRNGKey(0)
    k_params, k_x = jax.random.split(key)
    params = init_params(k_params, num_states, num_actions)
    x = jax.random.randint(k_x, (batch,), 0, num_states, dtype=jnp.int32)
    ref = reference_forward(x, params)

    # --- f32 weights: bit-faithful to the reference ---------------------
    packed_f32 = pack_params(params, weight_dtype=jnp.float32)

    # Multi-step batch grid (3 steps of 8 rows): exercises the pipelined,
    # "parallel" batch axis.
    out = jax.block_until_ready(
        qnetwork_forward(x, packed_f32, num_actions=num_actions, block_b=8))
    assert out.shape == (batch, num_actions), out.shape
    assert jnp.allclose(out, ref, atol=1e-5, rtol=1e-5), (out, ref)

    # Default block size (grid auto-splits to >=2 steps for v7x megacore).
    out2 = jax.block_until_ready(
        qnetwork_forward(x, packed_f32, num_actions=num_actions))
    assert jnp.allclose(out2, ref, atol=1e-5, rtol=1e-5), (out2, ref)

    # --- bf16 weights/activations (MXU-native on v6e/v7x) ---------------
    packed_bf16 = pack_params(params, weight_dtype=jnp.bfloat16)
    out3 = jax.block_until_ready(
        qnetwork_forward(x, packed_bf16, num_actions=num_actions))
    assert out3.shape == (batch, num_actions), out3.shape
    assert jnp.allclose(out3, ref, atol=1e-1, rtol=1e-1), (out3, ref)

    print("KERNEL_OK")
</pallas_src>

<mosaic_0001>
module attributes {stable_mosaic.version = 11 : i64} {
  func.func @_qnet_kernel(%arg0: i32, %arg1: memref<8x1xi32, #tpu.memory_space<vmem>>, %arg2: memref<128x128xf32, #tpu.memory_space<vmem>>, %arg3: memref<4x128x128xf32, #tpu.memory_space<vmem>>, %arg4: memref<8x128xf32, #tpu.memory_space<vmem>>, %arg5: memref<8x8xf32, #tpu.memory_space<vmem>>) attributes {dimension_semantics = [#tpu.dimension_semantics<parallel>], iteration_bounds = array<i64: 3>, scalar_prefetch = 0 : i64, scratch_operands = 0 : i64, tpu.core_type = #tpu.core_type<tc>, window_params = [{transform_indices = @transform_0, window_bounds = array<i64: 8, 1>}, {pipeline_mode = #tpu.pipeline_mode<synchronous>, transform_indices = @transform_1, window_bounds = array<i64: 128, 128>}, {pipeline_mode = #tpu.pipeline_mode<synchronous>, transform_indices = @transform_2, window_bounds = array<i64: 4, 128, 128>}, {pipeline_mode = #tpu.pipeline_mode<synchronous>, transform_indices = @transform_3, window_bounds = array<i64: 8, 128>}, {transform_indices = @transform_4, window_bounds = array<i64: 8, 8>}]} {
    %c0 = arith.constant 0 : index
    %c0_0 = arith.constant 0 : index
    %0 = vector.load %arg1[%c0, %c0_0] : memref<8x1xi32, #tpu.memory_space<vmem>>, vector<8x1xi32>
    %1 = tpu.iota {dimensions = array<i32: 1>} : vector<8x128xi32>
    %2 = vector.broadcast %0 : vector<8x1xi32> to vector<8x128xi32>
    %3 = arith.cmpi eq, %1, %2 : vector<8x128xi32>
    %4 = arith.extui %3 : vector<8x128xi1> to vector<8x128xi32>
    %5 = arith.sitofp %4 : vector<8x128xi32> to vector<8x128xf32>
    %c0_1 = arith.constant 0 : index
    %c0_2 = arith.constant 0 : index
    %6 = vector.load %arg2[%c0_1, %c0_2] : memref<128x128xf32, #tpu.memory_space<vmem>>, vector<128x128xf32>
    %cst = arith.constant dense<0.000000e+00> : vector<8x128xf32>
    %7 = tpu.matmul %5, %6, %cst {dimension_numbers = #tpu.dot_dimension_numbers<[1], [0], [0], [1], [0, 0, 1, 1], [], []>} : vector<8x128xf32>, vector<128x128xf32>, vector<8x128xf32> -> vector<8x128xf32>
    %c0_3 = arith.constant 0 : index
    %c0_4 = arith.constant 0 : index
    %8 = vector.load %arg4[%c0_3, %c0_4] : memref<8x128xf32, #tpu.memory_space<vmem>>, vector<8x128xf32>
    %c0_5 = arith.constant 0 : index
    %c0_6 = arith.constant 0 : index
    %c0_7 = arith.constant 0 : index
    %9 = vector.load %arg3[%c0_5, %c0_6, %c0_7] : memref<4x128x128xf32, #tpu.memory_space<vmem>>, vector<1x128x128xf32>
    %10 = vector.shape_cast %9 : vector<1x128x128xf32> to vector<128x128xf32>
    %cst_8 = arith.constant dense<0.000000e+00> : vector<8x128xf32>
    %11 = tpu.matmul %7, %10, %cst_8 {dimension_numbers = #tpu.dot_dimension_numbers<[1], [0], [0], [1], [0, 0, 1, 1], [], []>} : vector<8x128xf32>, vector<128x128xf32>, vector<8x128xf32> -> vector<8x128xf32>
    %12 = vector.extract_strided_slice %8 {offsets = [0, 0], sizes = [1, 128], strides = [1, 1]} : vector<8x128xf32> to vector<1x128xf32>
    %13 = vector.broadcast %12 : vector<1x128xf32> to vector<8x128xf32>
    %14 = arith.addf %11, %13 : vector<8x128xf32>
    %cst_9 = arith.constant 0.000000e+00 : f32
    %15 = vector.broadcast %cst_9 : f32 to vector<8x128xf32>
    %16 = arith.maximumf %14, %15 : vector<8x128xf32>
    %c1 = arith.constant 1 : index
    %c0_10 = arith.constant 0 : index
    %c0_11 = arith.constant 0 : index
    %17 = vector.load %arg3[%c1, %c0_10, %c0_11] : memref<4x128x128xf32, #tpu.memory_space<vmem>>, vector<1x128x128xf32>
    %18 = vector.shape_cast %17 : vector<1x128x128xf32> to vector<128x128xf32>
    %cst_12 = arith.constant dense<0.000000e+00> : vector<8x128xf32>
    %19 = tpu.matmul %16, %18, %cst_12 {dimension_numbers = #tpu.dot_dimension_numbers<[1], [0], [0], [1], [0, 0, 1, 1], [], []>} : vector<8x128xf32>, vector<128x128xf32>, vector<8x128xf32> -> vector<8x128xf32>
    %20 = vector.extract_strided_slice %8 {offsets = [1, 0], sizes = [1, 128], strides = [1, 1]} : vector<8x128xf32> to vector<1x128xf32>
    %21 = vector.broadcast %20 : vector<1x128xf32> to vector<8x128xf32>
    %22 = arith.addf %19, %21 : vector<8x128xf32>
    %cst_13 = arith.constant 0.000000e+00 : f32
    %23 = vector.broadcast %cst_13 : f32 to vector<8x128xf32>
    %24 = arith.maximumf %22, %23 : vector<8x128xf32>
    %c2 = arith.constant 2 : index
    %c0_14 = arith.constant 0 : index
    %c0_15 = arith.constant 0 : index
    %25 = vector.load %arg3[%c2, %c0_14, %c0_15] : memref<4x128x128xf32, #tpu.memory_space<vmem>>, vector<1x128x128xf32>
    %26 = vector.shape_cast %25 : vector<1x128x128xf32> to vector<128x128xf32>
    %cst_16 = arith.constant dense<0.000000e+00> : vector<8x128xf32>
    %27 = tpu.matmul %24, %26, %cst_16 {dimension_numbers = #tpu.dot_dimension_numbers<[1], [0], [0], [1], [0, 0, 1, 1], [], []>} : vector<8x128xf32>, vector<128x128xf32>, vector<8x128xf32> -> vector<8x128xf32>
    %28 = vector.extract_strided_slice %8 {offsets = [2, 0], sizes = [1, 128], strides = [1, 1]} : vector<8x128xf32> to vector<1x128xf32>
    %29 = vector.broadcast %28 : vector<1x128xf32> to vector<8x128xf32>
    %30 = arith.addf %27, %29 : vector<8x128xf32>
    %cst_17 = arith.constant 0.000000e+00 : f32
    %31 = vector.broadcast %cst_17 : f32 to vector<8x128xf32>
    %32 = arith.maximumf %30, %31 : vector<8x128xf32>
    %c3 = arith.constant 3 : index
    %c0_18 = arith.constant 0 : index
    %c0_19 = arith.constant 0 : index
    %33 = vector.load %arg3[%c3, %c0_18, %c0_19] : memref<4x128x128xf32, #tpu.memory_space<vmem>>, vector<1x128x128xf32>
    %34 = vector.shape_cast %33 : vector<1x128x128xf32> to vector<128x128xf32>
    %cst_20 = arith.constant dense<0.000000e+00> : vector<8x128xf32>
    %35 = tpu.matmul %32, %34, %cst_20 {dimension_numbers = #tpu.dot_dimension_numbers<[1], [0], [0], [1], [0, 0, 1, 1], [], []>} : vector<8x128xf32>, vector<128x128xf32>, vector<8x128xf32> -> vector<8x128xf32>
    %36 = vector.extract_strided_slice %8 {offsets = [3, 0], sizes = [1, 128], strides = [1, 1]} : vector<8x128xf32> to vector<1x128xf32>
    %37 = vector.broadcast %36 : vector<1x128xf32> to vector<8x128xf32>
    %38 = arith.addf %35, %37 : vector<8x128xf32>
    %39 = vector.extract_strided_slice %38 {offsets = [0, 0], sizes = [8, 8], strides = [1, 1]} : vector<8x128xf32> to vector<8x8xf32>
    %c0_21 = arith.constant 0 : index
    %c0_22 = arith.constant 0 : index
    %40 = vector.load %arg5[%c0_21, %c0_22] : memref<8x8xf32, #tpu.memory_space<vmem>>, vector<8x8xf32>
    tpu.vector_store %arg5[%c0_21, %c0_22], %39 {strides = array<i32>} : memref<8x8xf32, #tpu.memory_space<vmem>>, vector<8x8xf32>,
    return
  }
  func.func @transform_0(%arg0: i32) -> (i32, i32) {
    %c0_i32 = arith.constant 0 : i32
    %c0_i32_0 = arith.constant 0 : i32
    return %arg0, %c0_i32 : i32, i32
  }
  func.func @transform_1(%arg0: i32) -> (i32, i32) {
    %c0_i32 = arith.constant 0 : i32
    %c0_i32_0 = arith.constant 0 : i32
    %c0_i32_1 = arith.constant 0 : i32
    return %c0_i32, %c0_i32_0 : i32, i32
  }
  func.func @transform_2(%arg0: i32) -> (i32, i32, i32) {
    %c0_i32 = arith.constant 0 : i32
    %c0_i32_0 = arith.constant 0 : i32
    %c0_i32_1 = arith.constant 0 : i32
    %c0_i32_2 = arith.constant 0 : i32
    return %c0_i32, %c0_i32_0, %c0_i32_1 : i32, i32, i32
  }
  func.func @transform_3(%arg0: i32) -> (i32, i32) {
    %c0_i32 = arith.constant 0 : i32
    %c0_i32_0 = arith.constant 0 : i32
    %c0_i32_1 = arith.constant 0 : i32
    return %c0_i32, %c0_i32_0 : i32, i32
  }
  func.func @transform_4(%arg0: i32) -> (i32, i32) {
    %c0_i32 = arith.constant 0 : i32
    %c0_i32_0 = arith.constant 0 : i32
    return %arg0, %c0_i32 : i32, i32
  }
}

</mosaic_0001>

<llo_original>
// kernel: qnetwork_forward.1
$region0: #{qnetwork_forward.1}
  #allocation0 [shape = 'u32[]', space=smem, size = 0x4, offset = 0x4, fixed_abs, tag = 'smem constant byte address 0x4 - core index']
  #allocation1 [shape = 'u32[144,128]{1,0:T(1,128)}', space=vmem, size = 0x12000, scoped, tag = 'internal scratch']
  %s0 = inlined_call_operand.vmem [shape: s32[24,1], index: 0, kind: input, shape index: {}]
  %s1 = inlined_call_operand.hbm [shape: f32[128,128], index: 1, kind: input, shape index: {}]
  %s2 = inlined_call_operand.hbm [shape: f32[4,128,128], index: 2, kind: input, shape index: {}]
  %s3 = inlined_call_operand.vmem [shape: f32[8,128], index: 3, kind: input, shape index: {}]
  %s4 = inlined_call_operand.vmem [shape: f32[24,8], index: 4, kind: output, shape index: {}]
  %s5 = sld [smem:[#allocation0]]
  $region57: #{qnetwork_forward.1} parent=0
    _
  %s7 = ssub.s32 1, %s5
  %s8 = scalar_select 0, %s7, %s5
  $region1: #{qnetwork_forward.1} parent=0
    #allocation2 [shape = 'u8[65536]{0}', space=vmem, size = 0x10000, scoped, tag = 'input window, operand 1, single buffered']
    #allocation3 [shape = 's32[2]{0}', space=sflag, size = 0x8, scoped, tag = 'scoped memory for qnetwork_forward.1']
    #allocation4 [shape = 'u8[262144]{0}', space=vmem, size = 0x40000, scoped, tag = 'input window, operand 2, single buffered']
    #allocation5 [shape = 's32[1]{0}', space=sflag, size = 0x4, scoped, tag = 'scoped memory for qnetwork_forward.1']
    %9 = vsyncpa [#allocation3], 0
    %10 = vsyncpa [#allocation5], 0
    loop: start=0, step=1, limit=5
    $region2: #{qnetwork_forward.1} parent=1 // loop_pre_header
      _
    $region3: #{qnetwork_forward.1} parent=1 // loop_header
      %s12 = sphi 0, %s16
      %p13 = scmp.ge.s32.totalorder %s12, 5
      %s22 = sphi 0, %s24
      %s25 = sphi 0, %s22
      %s26 = sphi 0, %s25
      %s42 = sphi 0, %s26
      %s46 = sphi 0, %s46
      %s48 = sphi 0, %s46
      %s49 = sphi 0, %s48
      %s63 = sphi 0, %s49
      %s67 = sphi 0, %s67
      %s69 = sphi 0, %s67
      %s70 = sphi 0, %s69
      %s84 = sphi 0, %s70
      %s88 = sphi 0, %s88
      %s90 = sphi 0, %s88
      %s91 = sphi 0, %s90
      %s105 = sphi 0, %s91
      %s111 = sphi 0, %s113
      %s114 = sphi 0, %s111
      %s115 = sphi 0, %s114
      %s131 = sphi 0, %s115
    $region4: #{qnetwork_forward.1} parent=1 // loop_header_branch
      %15 = sbr.rel (%p13) target = $region8
    $region5: #{qnetwork_forward.1} parent=1 // loop_body
      %s17 = ssub.s32 %s12, 1
      %s18 = ssub.s32 %s12, 2
      %s19 = sadd.s32 %s12, 1
      %s20 = ssub.s32 %s12, %s19
      %p21 = scmp.eq.s32.totalorder %s20, 0
      %s23 = sadd.s32 %s22, 1
      %s24 = scalar_select %p21, %s22, %s23
      %p27 = pneg %p21
      %p28 = scmp.eq.s32.totalorder %s12, 2
      %p29 = por %p27, %p28
      %p30 = scmp.ne.s32.totalorder %s22, %s25
      %p31 = scmp.eq.s32.totalorder %s12, 0
      %p32 = por %p30, %p31
      %p33 = scmp.ne.s32.totalorder %s22, %s25
      %p34 = scmp.eq.s32.totalorder %s17, 2
      %p35 = por %p33, %p34
      %p36 = scmp.ne.s32.totalorder %s25, %s26
      %p37 = scmp.eq.s32.totalorder %s17, 0
      %p38 = por %p36, %p37
      %p39 = scmp.ne.s32.totalorder %s25, %s26
      %p40 = scmp.eq.s32.totalorder %s18, 2
      %p41 = por %p39, %p40
      %p43 = scmp.ne.s32.totalorder %s26, %s42
      %p44 = scmp.eq.s32.totalorder %s18, 0
      %p45 = por %p43, %p44
      %s47 = sadd.s32 %s46, 1
      %p50 = scmp.eq.s32.totalorder %s12, 2
      %p51 = scmp.ne.s32.totalorder %s46, %s48
      %p52 = scmp.eq.s32.totalorder %s12, 0
      %p53 = por %p51, %p52
      %p54 = scmp.ne.s32.totalorder %s46, %s48
      %p55 = scmp.eq.s32.totalorder %s17, 2
      %p56 = por %p54, %p55
      %p57 = scmp.ne.s32.totalorder %s48, %s49
      %p58 = scmp.eq.s32.totalorder %s17, 0
      %p59 = por %p57, %p58
      %p60 = scmp.ne.s32.totalorder %s48, %s49
      %p61 = scmp.eq.s32.totalorder %s18, 2
      %p62 = por %p60, %p61
      %p64 = scmp.ne.s32.totalorder %s49, %s63
      %p65 = scmp.eq.s32.totalorder %s18, 0
      %p66 = por %p64, %p65
      %s68 = sadd.s32 %s67, 1
      %p71 = scmp.eq.s32.totalorder %s12, 2
      %p72 = scmp.ne.s32.totalorder %s67, %s69
      %p73 = scmp.eq.s32.totalorder %s12, 0
      %p74 = por %p72, %p73
      %p75 = scmp.ne.s32.totalorder %s67, %s69
      %p76 = scmp.eq.s32.totalorder %s17, 2
      %p77 = por %p75, %p76
      %p78 = scmp.ne.s32.totalorder %s69, %s70
      %p79 = scmp.eq.s32.totalorder %s17, 0
      %p80 = por %p78, %p79
      %p81 = scmp.ne.s32.totalorder %s69, %s70
      %p82 = scmp.eq.s32.totalorder %s18, 2
      %p83 = por %p81, %p82
      %p85 = scmp.ne.s32.totalorder %s70, %s84
      %p86 = scmp.eq.s32.totalorder %s18, 0
      %p87 = por %p85, %p86
      %s89 = sadd.s32 %s88, 1
      %p92 = scmp.eq.s32.totalorder %s12, 2
      %p93 = scmp.ne.s32.totalorder %s88, %s90
      %p94 = scmp.eq.s32.totalorder %s12, 0
      %p95 = por %p93, %p94
      %p96 = scmp.ne.s32.totalorder %s88, %s90
      %p97 = scmp.eq.s32.totalorder %s17, 2
      %p98 = por %p96, %p97
      %p99 = scmp.ne.s32.totalorder %s90, %s91
      %p100 = scmp.eq.s32.totalorder %s17, 0
      %p101 = por %p99, %p100
      %p102 = scmp.ne.s32.totalorder %s90, %s91
      %p103 = scmp.eq.s32.totalorder %s18, 2
      %p104 = por %p102, %p103
      %p106 = scmp.ne.s32.totalorder %s91, %s105
      %p107 = scmp.eq.s32.totalorder %s18, 0
      %p108 = por %p106, %p107
      %s109 = ssub.s32 %s12, %s19
      %p110 = scmp.eq.s32.totalorder %s109, 0
      %s112 = sadd.s32 %s111, 1
      %s113 = scalar_select %p110, %s111, %s112
      %p116 = pneg %p110
      %p117 = scmp.eq.s32.totalorder %s12, 2
      %p118 = por %p116, %p117
      %p119 = scmp.ne.s32.totalorder %s111, %s114
      %p120 = scmp.eq.s32.totalorder %s12, 0
      %p121 = por %p119, %p120
      %p122 = scmp.ne.s32.totalorder %s111, %s114
      %p123 = scmp.eq.s32.totalorder %s17, 2
      %p124 = por %p122, %p123
      %p125 = scmp.ne.s32.totalorder %s114, %s115
      %p126 = scmp.eq.s32.totalorder %s17, 0
      %p127 = por %p125, %p126
      %p128 = scmp.ne.s32.totalorder %s114, %s115
      %p129 = scmp.eq.s32.totalorder %s18, 2
      %p130 = por %p128, %p129
      %p132 = scmp.ne.s32.totalorder %s115, %s131
      %p133 = scmp.eq.s32.totalorder %s18, 0
      %p134 = por %p132, %p133
      %p135 = scmp.le.s32.totalorder 1, %s12
      %p136 = scmp.lt.s32.totalorder %s12, 4
      %p137 = pnand %p135, %p136
      %p138 = pneg %p137
      // Predicated region
      $region9: #{qnetwork_forward.1} parent=5 // pred_check
        _
      $region10: #{qnetwork_forward.1} parent=5 // pred_check_branch
        %140 = sbr.rel (%p137) target = $region12
      $region11: #{qnetwork_forward.1} parent=5 // pred_region
        %s141 = ssub.s32 %s12, 1
        // Predicated region
        $region13: #{qnetwork_forward.1} parent=11 // pred_check
          %p142 = pneg %p59
        $region14: #{qnetwork_forward.1} parent=11 // pred_check_branch
          %144 = sbr.rel (%p142) target = $region16
        $region15: #{qnetwork_forward.1} parent=11 // pred_region
          %s146 = ssub.s32 2048, 2048
          %147 = vsyncadd [#allocation3], %s146
          %s148 = sshll.u32 [#allocation2], 4
          %s149 = int_to_ptr.vmem [resolvable:$true] %s148
          %154 = dma.hbm_to_vmem [thread:$0]  %s1, 2048, %s149, [#allocation3], 128, 128, 8
        $region16: #{qnetwork_forward.1} parent=11 // pred_fallthru
          _
        // Predicated region
        $region17: #{qnetwork_forward.1} parent=11 // pred_check
          %p155 = pneg %p80
        $region18: #{qnetwork_forward.1} parent=11 // pred_check_branch
          %157 = sbr.rel (%p155) target = $region20
        $region19: #{qnetwork_forward.1} parent=11 // pred_region
          %s159 = ssub.s32 8192, 8192
          %160 = vsyncadd [#allocation5], %s159
          %s161 = sshll.u32 [#allocation4], 4
          %s162 = int_to_ptr.vmem [resolvable:$true] %s161
          %167 = dma.hbm_to_vmem [thread:$0]  %s2, 8192, %s162, [#allocation5], 128, 128, 8
        $region20: #{qnetwork_forward.1} parent=11 // pred_fallthru
          _
        // Predicated region
        $region21: #{qnetwork_forward.1} parent=11 // pred_check
          %p168 = pneg %p101
        $region22: #{qnetwork_forward.1} parent=11 // pred_check_branch
          %170 = sbr.rel (%p168) target = $region24
        $region23: #{qnetwork_forward.1} parent=11 // pred_region
          _
        $region24: #{qnetwork_forward.1} parent=11 // pred_fallthru
          _
      $region12: #{qnetwork_forward.1} parent=5 // pred_fallthru
        _
      %p171 = scmp.lt.s32.totalorder %s12, 3
      // Predicated region
      $region25: #{qnetwork_forward.1} parent=5 // pred_check
        %p172 = pneg %p171
      $region26: #{qnetwork_forward.1} parent=5 // pred_check_branch
        %174 = sbr.rel (%p172) target = $region28
      $region27: #{qnetwork_forward.1} parent=5 // pred_region
        // Predicated region
        $region29: #{qnetwork_forward.1} parent=27 // pred_check
          %p175 = pneg %p32
        $region30: #{qnetwork_forward.1} parent=27 // pred_check_branch
          %177 = sbr.rel (%p175) target = $region32
        $region31: #{qnetwork_forward.1} parent=27 // pred_region
          %p178 = scmp.lt.s32.totalorder %s12, 2
          %s179 = scalar_select %p178, %s12, 2
          %s180 = smul.addr %s179, 8
          %s181 = scalar_lea.vmem %s0, %s180
        $region32: #{qnetwork_forward.1} parent=27 // pred_fallthru
          _
      $region28: #{qnetwork_forward.1} parent=5 // pred_fallthru
        _
      %p182 = scmp.le.s32.totalorder 1, %s12
      %p183 = scmp.lt.s32.totalorder %s12, 4
      %p184 = pnand %p182, %p183
      %p185 = pneg %p184
      // Predicated region
      $region33: #{qnetwork_forward.1} parent=5 // pred_check
        _
      $region34: #{qnetwork_forward.1} parent=5 // pred_check_branch
        %187 = sbr.rel (%p184) target = $region36
      $region35: #{qnetwork_forward.1} parent=5 // pred_region
        %s188 = ssub.s32 %s12, 1
        // Predicated region
        $region37: #{qnetwork_forward.1} parent=35 // pred_check
          %p189 = pneg %p59
        $region38: #{qnetwork_forward.1} parent=35 // pred_check_branch
          %191 = sbr.rel (%p189) target = $region40
        $region39: #{qnetwork_forward.1} parent=35 // pred_region
          %192 = dma.done [#allocation3], 2048
        $region40: #{qnetwork_forward.1} parent=35 // pred_fallthru
          _
        // Predicated region
        $region41: #{qnetwork_forward.1} parent=35 // pred_check
          %p193 = pneg %p80
        $region42: #{qnetwork_forward.1} parent=35 // pred_check_branch
          %195 = sbr.rel (%p193) target = $region44
        $region43: #{qnetwork_forward.1} parent=35 // pred_region
          %196 = dma.done [#allocation5], 8192
        $region44: #{qnetwork_forward.1} parent=35 // pred_fallthru
          _
        %p197 = scmp.lt.s32.totalorder %s17, 2
        %s198 = scalar_select %p197, %s17, 2
        %s199 = smul.addr %s198, 8
        %s200 = scalar_lea.vmem %s0, %s199
        %p201 = pneg %p38
        %p202 = pneg %p35
        %p203 = pneg %p59
        %p204 = pneg %p56
        %p205 = pneg %p80
        %p206 = pneg %p77
        %p207 = pneg %p101
        %p208 = pneg %p98
        %p209 = pneg %p127
        %p210 = pneg %p124
        %p211 = scmp.lt.s32.totalorder %s17, 2
        %s212 = scalar_select %p211, %s17, 2
        %s213 = smul.addr %s212, 8
        %s214 = scalar_lea.vmem %s4, %s213
        %p215 = scmp.lt.s32.totalorder %s17, 2
        %s216 = scalar_select %p215, %s17, 2
        %s217 = smul.addr %s216, 8
        %s218 = scalar_lea.vmem %s0, %s217
        %p219 = scmp.lt.s32.totalorder %s17, 2
        %s220 = scalar_select %p219, %s17, 2
        %s221 = smul.addr %s220, 8
        %s222 = scalar_lea.vmem %s4, %s221
        %v223 = vld [vmem:[%s218] sm:$0xff]
        %v224 = vlaneseq
        %v225 = vand.u32 %v224, 127
        %226 = vset.pattern.permute.xlu0 0
        %227 = vperm.xlu0 %226, %v223
        %v228 = vpop.permute.xlu0 %227
        %vm229 = vcmp.eq.s32.totalorder %v225, %v228
        %v230 = vsel %vm229, 1, 0
        %v231 = vcvt.s32.f32 %v230
        %v232 = vld [vmem:[#allocation2] sm:$0xff]
        %v233 = vld [vmem:[#allocation2 + $0x8] sm:$0xff]
        %v234 = vld [vmem:[#allocation2 + $0x10] sm:$0xff]
        %v235 = vld [vmem:[#allocation2 + $0x18] sm:$0xff]
        %v236 = vld [vmem:[#allocation2 + $0x20] sm:$0xff]
        %v237 = vld [vmem:[#allocation2 + $0x28] sm:$0xff]
        %v238 = vld [vmem:[#allocation2 + $0x30] sm:$0xff]
        %v239 = vld [vmem:[#allocation2 + $0x38] sm:$0xff]
        %v240 = vld [vmem:[#allocation2 + $0x40] sm:$0xff]
        %v241 = vld [vmem:[#allocation2 + $0x48] sm:$0xff]
        %v242 = vld [vmem:[#allocation2 + $0x50] sm:$0xff]
        %v243 = vld [vmem:[#allocation2 + $0x58] sm:$0xff]
        %v244 = vld [vmem:[#allocation2 + $0x60] sm:$0xff]
        %v245 = vld [vmem:[#allocation2 + $0x68] sm:$0xff]
        %v246 = vld [vmem:[#allocation2 + $0x70] sm:$0xff]
        %v247 = vld [vmem:[#allocation2 + $0x78] sm:$0xff]
        %248 = vmatprep.subr.mxu0 0.0
        %249 = vmatpush1.msra.mxu0 %v232
        %250 = vmatprep.subr.mxu0 0.0
        %251 = vmatpush1.msra.mxu0 %v233
        %252 = vmatprep.subr.mxu0 0.0
        %253 = vmatpush1.msra.mxu0 %v234
        %254 = vmatprep.subr.mxu0 0.0
        %255 = vmatpush1.msra.mxu0 %v235
        %256 = vmatprep.subr.mxu0 0.0
        %257 = vmatpush1.msra.mxu0 %v236
        %258 = vmatprep.subr.mxu0 0.0
        %259 = vmatpush1.msra.mxu0 %v237
        %260 = vmatprep.subr.mxu0 0.0
        %261 = vmatpush1.msra.mxu0 %v238
        %262 = vmatprep.subr.mxu0 0.0
        %263 = vmatpush1.msra.mxu0 %v239
        %264 = vmatprep.subr.mxu0 0.0
        %265 = vmatpush1.msra.mxu0 %v240
        %266 = vmatprep.subr.mxu0 0.0
        %267 = vmatpush1.msra.mxu0 %v241
        %268 = vmatprep.subr.mxu0 0.0
        %269 = vmatpush1.msra.mxu0 %v242
        %270 = vmatprep.subr.mxu0 0.0
        %271 = vmatpush1.msra.mxu0 %v243
        %272 = vmatprep.subr.mxu0 0.0
        %273 = vmatpush1.msra.mxu0 %v244
        %274 = vmatprep.subr.mxu0 0.0
        %275 = vmatpush1.msra.mxu0 %v245
        %276 = vmatprep.subr.mxu0 0.0
        %277 = vmatpush1.msra.mxu0 %v246
        %278 = vmatprep.subr.mxu0 0.0
        %279 = vmatpush1.msra.mxu0 %v247
        %280 = vmatprep.subr.mxu0 0.0
        %281 = vmatpush1.msra.mxu0 0.0
        %282 = vmatprep.subr.mxu0 0.0
        %283 = vmatpush1.msra.mxu0 0.0
        %284 = vmatprep.subr.mxu0 0.0
        %285 = vmatpush1.msra.mxu0 0.0
        %286 = vmatprep.subr.mxu0 0.0
        %287 = vmatpush1.msra.mxu0 0.0
        %288 = vmatprep.subr.mxu0 0.0
        %289 = vmatpush1.msra.mxu0 0.0
        %290 = vmatprep.subr.mxu0 0.0
        %291 = vmatpush1.msra.mxu0 0.0
        %292 = vmatprep.subr.mxu0 0.0
        %293 = vmatpush1.msra.mxu0 0.0
        %294 = vmatprep.subr.mxu0 0.0
        %295 = vmatpush1.msra.mxu0 0.0
        %296 = vmatprep.subr.mxu0 0.0
        %297 = vmatpush1.msra.mxu0 0.0
        %298 = vmatprep.subr.mxu0 0.0
        %299 = vmatpush1.msra.mxu0 0.0
        %300 = vmatprep.subr.mxu0 0.0
        %301 = vmatpush1.msra.mxu0 0.0
        %302 = vmatprep.subr.mxu0 0.0
        %303 = vmatpush1.msra.mxu0 0.0
        %304 = vmatprep.subr.mxu0 0.0
        %305 = vmatpush1.msra.mxu0 0.0
        %306 = vmatprep.subr.mxu0 0.0
        %307 = vmatpush1.msra.mxu0 0.0
        %308 = vmatprep.subr.mxu0 0.0
        %309 = vmatpush1.msra.mxu0 0.0
        %310 = vmatprep.subr.mxu0 0.0
        %311 = vmatpush1.msra.mxu0 0.0
        %312 = vmatprep.mubr.f32.mxu0 0.0
        %313 = vmatmul.mubr.f32.gmra.mrb[0].mxu0 %v231
        %v314 = vpop.f32.mrb[0].mxu0
        %v315 = vadd.f32 0.0, %v314
        %v316 = vpop.f32.mrb[0].mxu0
        %317 = vdwg.mxu0
        %v318 = vld [vmem:[%s3] sm:$0xff]
        %v319 = vld [vmem:[#allocation4] sm:$0xff]
        %v320 = vld [vmem:[#allocation4 + $0x8] sm:$0xff]
        %v321 = vld [vmem:[#allocation4 + $0x10] sm:$0xff]
        %v322 = vld [vmem:[#allocation4 + $0x18] sm:$0xff]
        %v323 = vld [vmem:[#allocation4 + $0x20] sm:$0xff]
        %v324 = vld [vmem:[#allocation4 + $0x28] sm:$0xff]
        %v325 = vld [vmem:[#allocation4 + $0x30] sm:$0xff]
        %v326 = vld [vmem:[#allocation4 + $0x38] sm:$0xff]
        %v327 = vld [vmem:[#allocation4 + $0x40] sm:$0xff]
        %v328 = vld [vmem:[#allocation4 + $0x48] sm:$0xff]
        %v329 = vld [vmem:[#allocation4 + $0x50] sm:$0xff]
        %v330 = vld [vmem:[#allocation4 + $0x58] sm:$0xff]
        %v331 = vld [vmem:[#allocation4 + $0x60] sm:$0xff]
        %v332 = vld [vmem:[#allocation4 + $0x68] sm:$0xff]
        %v333 = vld [vmem:[#allocation4 + $0x70] sm:$0xff]
        %v334 = vld [vmem:[#allocation4 + $0x78] sm:$0xff]
        %v335 = vlaneseq
        %v336 = vshrl.u32 %v335, 7
        %v337 = vsub.s32 0, %v336
        %v338 = vrot.slane %v318, %v337
        %339 = vmatprep.subr.mxu0 0.0
        %340 = vmatpush1.msra.mxu0 %v319
        %341 = vmatprep.subr.mxu0 0.0
        %342 = vmatpush1.msra.mxu0 %v320
        %343 = vmatprep.subr.mxu0 0.0
        %344 = vmatpush1.msra.mxu0 %v321
        %345 = vmatprep.subr.mxu0 0.0
        %346 = vmatpush1.msra.mxu0 %v322
        %347 = vmatprep.subr.mxu0 0.0
        %348 = vmatpush1.msra.mxu0 %v323
        %349 = vmatprep.subr.mxu0 0.0
        %350 = vmatpush1.msra.mxu0 %v324
        %351 = vmatprep.subr.mxu0 0.0
        %352 = vmatpush1.msra.mxu0 %v325
        %353 = vmatprep.subr.mxu0 0.0
        %354 = vmatpush1.msra.mxu0 %v326
        %355 = vmatprep.subr.mxu0 0.0
        %356 = vmatpush1.msra.mxu0 %v327
        %357 = vmatprep.subr.mxu0 0.0
        %358 = vmatpush1.msra.mxu0 %v328
        %359 = vmatprep.subr.mxu0 0.0
        %360 = vmatpush1.msra.mxu0 %v329
        %361 = vmatprep.subr.mxu0 0.0
        %362 = vmatpush1.msra.mxu0 %v330
        %363 = vmatprep.subr.mxu0 0.0
        %364 = vmatpush1.msra.mxu0 %v331
        %365 = vmatprep.subr.mxu0 0.0
        %366 = vmatpush1.msra.mxu0 %v332
        %367 = vmatprep.subr.mxu0 0.0
        %368 = vmatpush1.msra.mxu0 %v333
        %369 = vmatprep.subr.mxu0 0.0
        %370 = vmatpush1.msra.mxu0 %v334
        %371 = vmatprep.subr.mxu0 0.0
        %372 = vmatpush1.msra.mxu0 0.0
        %373 = vmatprep.subr.mxu0 0.0
        %374 = vmatpush1.msra.mxu0 0.0
        %375 = vmatprep.subr.mxu0 0.0
        %376 = vmatpush1.msra.mxu0 0.0
        %377 = vmatprep.subr.mxu0 0.0
        %378 = vmatpush1.msra.mxu0 0.0
        %379 = vmatprep.subr.mxu0 0.0
        %380 = vmatpush1.msra.mxu0 0.0
        %381 = vmatprep.subr.mxu0 0.0
        %382 = vmatpush1.msra.mxu0 0.0
        %383 = vmatprep.subr.mxu0 0.0
        %384 = vmatpush1.msra.mxu0 0.0
        %385 = vmatprep.subr.mxu0 0.0
        %386 = vmatpush1.msra.mxu0 0.0
        %387 = vmatprep.subr.mxu0 0.0
        %388 = vmatpush1.msra.mxu0 0.0
        %389 = vmatprep.subr.mxu0 0.0
        %390 = vmatpush1.msra.mxu0 0.0
        %391 = vmatprep.subr.mxu0 0.0
        %392 = vmatpush1.msra.mxu0 0.0
        %393 = vmatprep.subr.mxu0 0.0
        %394 = vmatpush1.msra.mxu0 0.0
        %395 = vmatprep.subr.mxu0 0.0
        %396 = vmatpush1.msra.mxu0 0.0
        %397 = vmatprep.subr.mxu0 0.0
        %398 = vmatpush1.msra.mxu0 0.0
        %399 = vmatprep.subr.mxu0 0.0
        %400 = vmatpush1.msra.mxu0 0.0
        %401 = vmatprep.subr.mxu0 0.0
        %402 = vmatpush1.msra.mxu0 0.0
        %403 = vmatprep.mubr.f32.mxu0 0.0
        %404 = vmatmul.mubr.f32.gmra.mrb[0].mxu0 %v315
        %v405 = vpop.f32.mrb[0].mxu0
        %v406 = vadd.f32 %v338, %v405
        %v407 = vpop.f32.mrb[0].mxu0
        %408 = vdwg.mxu0
        %v409 = vmax.f32 %v406, 0.0
        %s410 = scalar_lea.vmem [#allocation4], 128
        %v411 = vld [vmem:[%s410] sm:$0xff]
        %v412 = vld [vmem:[%s410 + $0x8] sm:$0xff]
        %v413 = vld [vmem:[%s410 + $0x10] sm:$0xff]
        %v414 = vld [vmem:[%s410 + $0x18] sm:$0xff]
        %v415 = vld [vmem:[%s410 + $0x20] sm:$0xff]
        %v416 = vld [vmem:[%s410 + $0x28] sm:$0xff]
        %v417 = vld [vmem:[%s410 + $0x30] sm:$0xff]
        %v418 = vld [vmem:[%s410 + $0x38] sm:$0xff]
        %v419 = vld [vmem:[%s410 + $0x40] sm:$0xff]
        %v420 = vld [vmem:[%s410 + $0x48] sm:$0xff]
        %v421 = vld [vmem:[%s410 + $0x50] sm:$0xff]
        %v422 = vld [vmem:[%s410 + $0x58] sm:$0xff]
        %v423 = vld [vmem:[%s410 + $0x60] sm:$0xff]
        %v424 = vld [vmem:[%s410 + $0x68] sm:$0xff]
        %v425 = vld [vmem:[%s410 + $0x70] sm:$0xff]
        %v426 = vld [vmem:[%s410 + $0x78] sm:$0xff]
        %v427 = vlaneseq
        %v428 = vshrl.u32 %v427, 7
        %v429 = vsub.s32 1, %v428
        %v430 = vrot.slane %v318, %v429
        %431 = vmatprep.subr.mxu0 0.0
        %432 = vmatpush1.msra.mxu0 %v411
        %433 = vmatprep.subr.mxu0 0.0
        %434 = vmatpush1.msra.mxu0 %v412
        %435 = vmatprep.subr.mxu0 0.0
        %436 = vmatpush1.msra.mxu0 %v413
        %437 = vmatprep.subr.mxu0 0.0
        %438 = vmatpush1.msra.mxu0 %v414
        %439 = vmatprep.subr.mxu0 0.0
        %440 = vmatpush1.msra.mxu0 %v415
        %441 = vmatprep.subr.mxu0 0.0
        %442 = vmatpush1.msra.mxu0 %v416
        %443 = vmatprep.subr.mxu0 0.0
        %444 = vmatpush1.msra.mxu0 %v417
        %445 = vmatprep.subr.mxu0 0.0
        %446 = vmatpush1.msra.mxu0 %v418
        %447 = vmatprep.subr.mxu0 0.0
        %448 = vmatpush1.msra.mxu0 %v419
        %449 = vmatprep.subr.mxu0 0.0
        %450 = vmatpush1.msra.mxu0 %v420
        %451 = vmatprep.subr.mxu0 0.0
        %452 = vmatpush1.msra.mxu0 %v421
        %453 = vmatprep.subr.mxu0 0.0
        %454 = vmatpush1.msra.mxu0 %v422
        %455 = vmatprep.subr.mxu0 0.0
        %456 = vmatpush1.msra.mxu0 %v423
        %457 = vmatprep.subr.mxu0 0.0
        %458 = vmatpush1.msra.mxu0 %v424
        %459 = vmatprep.subr.mxu0 0.0
        %460 = vmatpush1.msra.mxu0 %v425
        %461 = vmatprep.subr.mxu0 0.0
        %462 = vmatpush1.msra.mxu0 %v426
        %463 = vmatprep.subr.mxu0 0.0
        %464 = vmatpush1.msra.mxu0 0.0
        %465 = vmatprep.subr.mxu0 0.0
        %466 = vmatpush1.msra.mxu0 0.0
        %467 = vmatprep.subr.mxu0 0.0
        %468 = vmatpush1.msra.mxu0 0.0
        %469 = vmatprep.subr.mxu0 0.0
        %470 = vmatpush1.msra.mxu0 0.0
        %471 = vmatprep.subr.mxu0 0.0
        %472 = vmatpush1.msra.mxu0 0.0
        %473 = vmatprep.subr.mxu0 0.0
        %474 = vmatpush1.msra.mxu0 0.0
        %475 = vmatprep.subr.mxu0 0.0
        %476 = vmatpush1.msra.mxu0 0.0
        %477 = vmatprep.subr.mxu0 0.0
        %478 = vmatpush1.msra.mxu0 0.0
        %479 = vmatprep.subr.mxu0 0.0
        %480 = vmatpush1.msra.mxu0 0.0
        %481 = vmatprep.subr.mxu0 0.0
        %482 = vmatpush1.msra.mxu0 0.0
        %483 = vmatprep.subr.mxu0 0.0
        %484 = vmatpush1.msra.mxu0 0.0
        %485 = vmatprep.subr.mxu0 0.0
        %486 = vmatpush1.msra.mxu0 0.0
        %487 = vmatprep.subr.mxu0 0.0
        %488 = vmatpush1.msra.mxu0 0.0
        %489 = vmatprep.subr.mxu0 0.0
        %490 = vmatpush1.msra.mxu0 0.0
        %491 = vmatprep.subr.mxu0 0.0
        %492 = vmatpush1.msra.mxu0 0.0
        %493 = vmatprep.subr.mxu0 0.0
        %494 = vmatpush1.msra.mxu0 0.0
        %495 = vmatprep.mubr.f32.mxu0 0.0
        %496 = vmatmul.mubr.f32.gmra.mrb[0].mxu0 %v409
        %v497 = vpop.f32.mrb[0].mxu0
        %v498 = vadd.f32 %v430, %v497
        %v499 = vpop.f32.mrb[0].mxu0
        %500 = vdwg.mxu0
        %v501 = vmax.f32 %v498, 0.0
        %s502 = scalar_lea.vmem [#allocation4], 256
        %v503 = vld [vmem:[%s502] sm:$0xff]
        %v504 = vld [vmem:[%s502 + $0x8] sm:$0xff]
        %v505 = vld [vmem:[%s502 + $0x10] sm:$0xff]
        %v506 = vld [vmem:[%s502 + $0x18] sm:$0xff]
        %v507 = vld [vmem:[%s502 + $0x20] sm:$0xff]
        %v508 = vld [vmem:[%s502 + $0x28] sm:$0xff]
        %v509 = vld [vmem:[%s502 + $0x30] sm:$0xff]
        %v510 = vld [vmem:[%s502 + $0x38] sm:$0xff]
        %v511 = vld [vmem:[%s502 + $0x40] sm:$0xff]
        %v512 = vld [vmem:[%s502 + $0x48] sm:$0xff]
        %v513 = vld [vmem:[%s502 + $0x50] sm:$0xff]
        %v514 = vld [vmem:[%s502 + $0x58] sm:$0xff]
        %v515 = vld [vmem:[%s502 + $0x60] sm:$0xff]
        %v516 = vld [vmem:[%s502 + $0x68] sm:$0xff]
        %v517 = vld [vmem:[%s502 + $0x70] sm:$0xff]
        %v518 = vld [vmem:[%s502 + $0x78] sm:$0xff]
        %v519 = vlaneseq
        %v520 = vshrl.u32 %v519, 7
        %v521 = vsub.s32 2, %v520
        %v522 = vrot.slane %v318, %v521
        %523 = vmatprep.subr.mxu0 0.0
        %524 = vmatpush1.msra.mxu0 %v503
        %525 = vmatprep.subr.mxu0 0.0
        %526 = vmatpush1.msra.mxu0 %v504
        %527 = vmatprep.subr.mxu0 0.0
        %528 = vmatpush1.msra.mxu0 %v505
        %529 = vmatprep.subr.mxu0 0.0
        %530 = vmatpush1.msra.mxu0 %v506
        %531 = vmatprep.subr.mxu0 0.0
        %532 = vmatpush1.msra.mxu0 %v507
        %533 = vmatprep.subr.mxu0 0.0
        %534 = vmatpush1.msra.mxu0 %v508
        %535 = vmatprep.subr.mxu0 0.0
        %536 = vmatpush1.msra.mxu0 %v509
        %537 = vmatprep.subr.mxu0 0.0
        %538 = vmatpush1.msra.mxu0 %v510
        %539 = vmatprep.subr.mxu0 0.0
        %540 = vmatpush1.msra.mxu0 %v511
        %541 = vmatprep.subr.mxu0 0.0
        %542 = vmatpush1.msra.mxu0 %v512
        %543 = vmatprep.subr.mxu0 0.0
        %544 = vmatpush1.msra.mxu0 %v513
        %545 = vmatprep.subr.mxu0 0.0
        %546 = vmatpush1.msra.mxu0 %v514
        %547 = vmatprep.subr.mxu0 0.0
        %548 = vmatpush1.msra.mxu0 %v515
        %549 = vmatprep.subr.mxu0 0.0
        %550 = vmatpush1.msra.mxu0 %v516
        %551 = vmatprep.subr.mxu0 0.0
        %552 = vmatpush1.msra.mxu0 %v517
        %553 = vmatprep.subr.mxu0 0.0
        %554 = vmatpush1.msra.mxu0 %v518
        %555 = vmatprep.subr.mxu0 0.0
        %556 = vmatpush1.msra.mxu0 0.0
        %557 = vmatprep.subr.mxu0 0.0
        %558 = vmatpush1.msra.mxu0 0.0
        %559 = vmatprep.subr.mxu0 0.0
        %560 = vmatpush1.msra.mxu0 0.0
        %561 = vmatprep.subr.mxu0 0.0
        %562 = vmatpush1.msra.mxu0 0.0
        %563 = vmatprep.subr.mxu0 0.0
        %564 = vmatpush1.msra.mxu0 0.0
        %565 = vmatprep.subr.mxu0 0.0
        %566 = vmatpush1.msra.mxu0 0.0
        %567 = vmatprep.subr.mxu0 0.0
        %568 = vmatpush1.msra.mxu0 0.0
        %569 = vmatprep.subr.mxu0 0.0
        %570 = vmatpush1.msra.mxu0 0.0
        %571 = vmatprep.subr.mxu0 0.0
        %572 = vmatpush1.msra.mxu0 0.0
        %573 = vmatprep.subr.mxu0 0.0
        %574 = vmatpush1.msra.mxu0 0.0
        %575 = vmatprep.subr.mxu0 0.0
        %576 = vmatpush1.msra.mxu0 0.0
        %577 = vmatprep.subr.mxu0 0.0
        %578 = vmatpush1.msra.mxu0 0.0
        %579 = vmatprep.subr.mxu0 0.0
        %580 = vmatpush1.msra.mxu0 0.0
        %581 = vmatprep.subr.mxu0 0.0
        %582 = vmatpush1.msra.mxu0 0.0
        %583 = vmatprep.subr.mxu0 0.0
        %584 = vmatpush1.msra.mxu0 0.0
        %585 = vmatprep.subr.mxu0 0.0
        %586 = vmatpush1.msra.mxu0 0.0
        %587 = vmatprep.mubr.f32.mxu0 0.0
        %588 = vmatmul.mubr.f32.gmra.mrb[0].mxu0 %v501
        %v589 = vpop.f32.mrb[0].mxu0
        %v590 = vadd.f32 %v522, %v589
        %v591 = vpop.f32.mrb[0].mxu0
        %592 = vdwg.mxu0
        %v593 = vmax.f32 %v590, 0.0
        %s594 = scalar_lea.vmem [#allocation4], 384
        %v595 = vld [vmem:[%s594] sm:$0xff]
        %v596 = vld [vmem:[%s594 + $0x8] sm:$0xff]
        %v597 = vld [vmem:[%s594 + $0x10] sm:$0xff]
        %v598 = vld [vmem:[%s594 + $0x18] sm:$0xff]
        %v599 = vld [vmem:[%s594 + $0x20] sm:$0xff]
        %v600 = vld [vmem:[%s594 + $0x28] sm:$0xff]
        %v601 = vld [vmem:[%s594 + $0x30] sm:$0xff]
        %v602 = vld [vmem:[%s594 + $0x38] sm:$0xff]
        %v603 = vld [vmem:[%s594 + $0x40] sm:$0xff]
        %v604 = vld [vmem:[%s594 + $0x48] sm:$0xff]
        %v605 = vld [vmem:[%s594 + $0x50] sm:$0xff]
        %v606 = vld [vmem:[%s594 + $0x58] sm:$0xff]
        %v607 = vld [vmem:[%s594 + $0x60] sm:$0xff]
        %v608 = vld [vmem:[%s594 + $0x68] sm:$0xff]
        %v609 = vld [vmem:[%s594 + $0x70] sm:$0xff]
        %v610 = vld [vmem:[%s594 + $0x78] sm:$0xff]
        %v611 = vlaneseq
        %v612 = vshrl.u32 %v611, 7
        %v613 = vsub.s32 3, %v612
        %v614 = vrot.slane %v318, %v613
        %615 = vmatprep.subr.mxu0 0.0
        %616 = vmatpush1.msra.mxu0 %v595
        %617 = vmatprep.subr.mxu0 0.0
        %618 = vmatpush1.msra.mxu0 %v596
        %619 = vmatprep.subr.mxu0 0.0
        %620 = vmatpush1.msra.mxu0 %v597
        %621 = vmatprep.subr.mxu0 0.0
        %622 = vmatpush1.msra.mxu0 %v598
        %623 = vmatprep.subr.mxu0 0.0
        %624 = vmatpush1.msra.mxu0 %v599
        %625 = vmatprep.subr.mxu0 0.0
        %626 = vmatpush1.msra.mxu0 %v600
        %627 = vmatprep.subr.mxu0 0.0
        %628 = vmatpush1.msra.mxu0 %v601
        %629 = vmatprep.subr.mxu0 0.0
        %630 = vmatpush1.msra.mxu0 %v602
        %631 = vmatprep.subr.mxu0 0.0
        %632 = vmatpush1.msra.mxu0 %v603
        %633 = vmatprep.subr.mxu0 0.0
        %634 = vmatpush1.msra.mxu0 %v604
        %635 = vmatprep.subr.mxu0 0.0
        %636 = vmatpush1.msra.mxu0 %v605
        %637 = vmatprep.subr.mxu0 0.0
        %638 = vmatpush1.msra.mxu0 %v606
        %639 = vmatprep.subr.mxu0 0.0
        %640 = vmatpush1.msra.mxu0 %v607
        %641 = vmatprep.subr.mxu0 0.0
        %642 = vmatpush1.msra.mxu0 %v608
        %643 = vmatprep.subr.mxu0 0.0
        %644 = vmatpush1.msra.mxu0 %v609
        %645 = vmatprep.subr.mxu0 0.0
        %646 = vmatpush1.msra.mxu0 %v610
        %647 = vmatprep.subr.mxu0 0.0
        %648 = vmatpush1.msra.mxu0 0.0
        %649 = vmatprep.subr.mxu0 0.0
        %650 = vmatpush1.msra.mxu0 0.0
        %651 = vmatprep.subr.mxu0 0.0
        %652 = vmatpush1.msra.mxu0 0.0
        %653 = vmatprep.subr.mxu0 0.0
        %654 = vmatpush1.msra.mxu0 0.0
        %655 = vmatprep.subr.mxu0 0.0
        %656 = vmatpush1.msra.mxu0 0.0
        %657 = vmatprep.subr.mxu0 0.0
        %658 = vmatpush1.msra.mxu0 0.0
        %659 = vmatprep.subr.mxu0 0.0
        %660 = vmatpush1.msra.mxu0 0.0
        %661 = vmatprep.subr.mxu0 0.0
        %662 = vmatpush1.msra.mxu0 0.0
        %663 = vmatprep.subr.mxu0 0.0
        %664 = vmatpush1.msra.mxu0 0.0
        %665 = vmatprep.subr.mxu0 0.0
        %666 = vmatpush1.msra.mxu0 0.0
        %667 = vmatprep.subr.mxu0 0.0
        %668 = vmatpush1.msra.mxu0 0.0
        %669 = vmatprep.subr.mxu0 0.0
        %670 = vmatpush1.msra.mxu0 0.0
        %671 = vmatprep.subr.mxu0 0.0
        %672 = vmatpush1.msra.mxu0 0.0
        %673 = vmatprep.subr.mxu0 0.0
        %674 = vmatpush1.msra.mxu0 0.0
        %675 = vmatprep.subr.mxu0 0.0
        %676 = vmatpush1.msra.mxu0 0.0
        %677 = vmatprep.subr.mxu0 0.0
        %678 = vmatpush1.msra.mxu0 0.0
        %679 = vmatprep.mubr.f32.mxu0 0.0
        %680 = vmatmul.mubr.f32.gmra.mrb[0].mxu0 %v593
        %v681 = vpop.f32.mrb[0].mxu0
        %v682 = vadd.f32 %v614, %v681
        %v683 = vpop.f32.mrb[0].mxu0
        %684 = vdwg.mxu0
        %vm685 = vcmask 64512
        %686 = vst.msk [vmem:[%s222] sm:$0xff] %vm685, %v682
        %p687 = scmp.lt.s32.totalorder %s17, 2
        %s688 = scalar_select %p687, %s17, 2
        %s689 = smul.addr %s688, 8
        %s690 = scalar_lea.vmem %s4, %s689
        // Predicated region
        $region45: #{qnetwork_forward.1} parent=35 // pred_check
          %p691 = pneg %p124
        $region46: #{qnetwork_forward.1} parent=35 // pred_check_branch
          %693 = sbr.rel (%p691) target = $region48
        $region47: #{qnetwork_forward.1} parent=35 // pred_region
          _
        $region48: #{qnetwork_forward.1} parent=35 // pred_fallthru
          _
      $region36: #{qnetwork_forward.1} parent=5 // pred_fallthru
        _
      %p694 = scmp.le.s32.totalorder 2, %s12
      // Predicated region
      $region49: #{qnetwork_forward.1} parent=5 // pred_check
        %p695 = pneg %p694
      $region50: #{qnetwork_forward.1} parent=5 // pred_check_branch
        %697 = sbr.rel (%p695) target = $region52
      $region51: #{qnetwork_forward.1} parent=5 // pred_region
        %s698 = ssub.s32 %s12, 2
        // Predicated region
        $region53: #{qnetwork_forward.1} parent=51 // pred_check
          %p699 = pneg %p130
        $region54: #{qnetwork_forward.1} parent=51 // pred_check_branch
          %701 = sbr.rel (%p699) target = $region56
        $region55: #{qnetwork_forward.1} parent=51 // pred_region
          %p702 = scmp.lt.s32.totalorder %s18, 2
          %s703 = scalar_select %p702, %s18, 2
          %s704 = smul.addr %s703, 8
          %s705 = scalar_lea.vmem %s4, %s704
        $region56: #{qnetwork_forward.1} parent=51 // pred_fallthru
          _
      $region52: #{qnetwork_forward.1} parent=5 // pred_fallthru
        _
    $region6: #{qnetwork_forward.1} parent=1 // loop_footer
      %s16 = sadd.s32 1, %s12
    $region7: #{qnetwork_forward.1} parent=1 // loop_footer_branch
      %11 = sbr.rel target = $region3
    $region8: #{qnetwork_forward.1} parent=1 // loop_exit
      _
    %706 = vsyncpa [#allocation3], 1
    %s707 = scalar_lea.sflag [#allocation3], 1
    %708 = vsyncpa %s707, 1
    %709 = vsyncpa [#allocation5], 1

</llo_original>
